<compile_context>
chip_gen: v7x
topology: tpu7x:2x2x1
jax: 0.10.0
libtpu: 0.0.40
codegen_flags: <defaults>
</compile_context>

<pallas_src>
import math

import numpy as np
import jax
import jax.numpy as jnp
from jax import lax
from jax.experimental import pallas as pl
from jax.experimental.pallas import tpu as pltpu


# ---------------------------------------------------------------------------
# Kernel core: emissions (transposed) + Viterbi decode for one batch block
# ---------------------------------------------------------------------------
def _emissions_and_viterbi(x3t_ref, wc_ref, wl_ref, crf_ref, T, bb):
    C, H = wl_ref.shape

    # ---- emissions, fully transposed: conv folded into ONE K=3H+1 matmul -------
    # x3t_ref: (3H+1, N) bf16, column index = t*bb + b (time-major within block)
    y = jnp.dot(wc_ref[...], x3t_ref[...],
                preferred_element_type=jnp.float32)            # (H, N) f32
    y = jnp.maximum(y, 0.0)                                    # ReLU
    emT = jnp.dot(wl_ref[...], y.astype(wl_ref.dtype),
                  preferred_element_type=jnp.float32)          # (C, N) f32, lane-dense

    crf = crf_ref[...]                                         # (C, C+3) f32
    # trans_cols[j][c, 0] = trans[j, c]   (hoisted once; reused every timestep)
    trans_cols = [crf[:, j:j + 1] for j in range(C)]
    bl_col = crf[:, C:C + 1]                                   # linear bias  (C,1)
    start_col = crf[:, C + 1:C + 2]                            # CRF start    (C,1)
    end_col = crf[:, C + 2:C + 3]                              # CRF end      (C,1)

    emT = emT + bl_col                                         # lane-broadcast add

    def em_at(t):                                              # (C, bb) static lane slice
        return emT[:, t * bb:(t + 1) * bb]

    # ---- Viterbi forward recursion (unrolled over T and C; batch on lanes) -----
    score = start_col + em_at(0)                               # (C, bb)
    hist = []                                                  # backpointers, in registers
    for t in range(1, T):
        best = score[0:1, :] + trans_cols[0]                   # prev tag j = 0
        bp = jnp.zeros((C, bb), jnp.int32)
        for j in range(1, C):
            cand = score[j:j + 1, :] + trans_cols[j]
            take = cand > best                                 # strict > = first-occurrence argmax
            bp = jnp.where(take, j, bp)
            best = jnp.maximum(best, cand)
        hist.append(bp)
        score = best + em_at(t)
    score = score + end_col

    # final argmax over tags (sublane axis), unrolled
    best = score[0:1, :]
    tag = jnp.zeros((1, bb), jnp.int32)
    for c in range(1, C):
        cand = score[c:c + 1, :]
        take = cand > best
        tag = jnp.where(take, c, tag)
        best = jnp.maximum(best, cand)

    # ---- backtrack: accumulate the full (T, bb) path in registers --------------
    t_iota = lax.broadcasted_iota(jnp.int32, (T, bb), 0)
    path = jnp.where(t_iota == (T - 1), tag, 0)
    for t in range(T - 2, -1, -1):
        bp = hist[t]                                           # backpointers t+1 -> t
        prev = bp[0:1, :]
        for c in range(1, C):
            prev = jnp.where(tag == c, bp[c:c + 1, :], prev)
        path = jnp.where(t_iota == t, prev, path)
        tag = prev
    return path, emT


def _locate_subject_kernel(x3t_ref, wc_ref, wl_ref, crf_ref, path_ref):
    _, T, bb = path_ref.shape
    path, _ = _emissions_and_viterbi(x3t_ref, wc_ref, wl_ref, crf_ref, T, bb)
    path_ref[0] = path                                         # single block store


def _locate_subject_kernel_with_em(x3t_ref, wc_ref, wl_ref, crf_ref, path_ref, em_ref):
    _, T, bb = path_ref.shape
    path, emT = _emissions_and_viterbi(x3t_ref, wc_ref, wl_ref, crf_ref, T, bb)
    path_ref[0] = path
    em_ref[...] = emT                                          # lane-dense (C, T*bb) store


# ---------------------------------------------------------------------------
# Wrapper: im2col + weight prep on HBM (plain XLA), one fused pallas_call
# ---------------------------------------------------------------------------
def locate_subject_forward(x, params, block_b=None, return_emissions=False):
    """x: (B, T, H) f32 sentence features -> (B, T) int32 best paths
       (+ (B, T, C) f32 emissions if return_emissions)."""
    B, T, H = x.shape
    C = params["w_lin"].shape[0]
    K1 = 3 * H + 1

    # Lane width per block is N = T*bb; keep it a multiple of 128 so every block
    # slice / store is vreg-aligned and lane-dense.
    base = 128 // math.gcd(T, 128)
    if block_b is None:
        # 128 lanes by default (full vreg, matches v5e's 128-wide MXU pass); bump to
        # 256 lanes (v6e/v7x MXU width) when the batch still leaves >= 2 grid steps.
        bb = base * 2 if B >= 4 * base else base
    else:
        bb = -(-block_b // base) * base
    Bp = -(-B // bb) * bb
    Nb = Bp // bb
    N = T * bb

    # ---- wrapper-side im2col (keeps ALL layout plumbing out of the kernel) -----
    xb = x.astype(jnp.bfloat16)
    if Bp != B:
        xb = jnp.pad(xb, ((0, Bp - B), (0, 0), (0, 0)))
    xp = jnp.pad(xb, ((0, 0), (1, 1), (0, 0)))                 # conv padding=1
    taps = [xp[:, k:k + T, :] for k in range(3)]
    ones = jnp.ones((Bp, T, 1), jnp.bfloat16)                  # folds the conv bias
    x3 = jnp.concatenate(taps + [ones], axis=-1)               # (Bp, T, 3H+1)
    # transposed, time-major-within-block: column index = i*T*bb + t*bb + b
    x3t = (x3.reshape(Nb, bb, T, K1)
              .transpose(3, 0, 2, 1)
              .reshape(K1, Nb * N))

    # ---- weights: conv taps stacked + bias column folded; matmul operands bf16 --
    w_conv = params["w_conv"]                                  # (H, H, 3) PyTorch layout
    wc_aug = jnp.concatenate([w_conv[:, :, 0], w_conv[:, :, 1], w_conv[:, :, 2],
                              params["b_conv"][:, None]],
                             axis=1).astype(jnp.bfloat16)      # (H, 3H+1)
    wl_t = params["w_lin"].astype(jnp.bfloat16)                # (C, H)
    # one small CRF/bias tile: [trans^T | b_lin | start | end]
    crf = jnp.concatenate([params["transitions"].T,
                           params["b_lin"][:, None],
                           params["start_transitions"][:, None],
                           params["end_transitions"][:, None]],
                          axis=1).astype(jnp.float32)          # (C, C+3)

    in_specs = [
        pl.BlockSpec((K1, N), lambda i: (0, i)),
        pl.BlockSpec((H, K1), lambda i: (0, 0)),
        pl.BlockSpec((C, H), lambda i: (0, 0)),
        pl.BlockSpec((C, C + 3), lambda i: (0, 0)),
    ]
    path_spec = pl.BlockSpec((1, T, bb), lambda i: (i, 0, 0))
    path_shape = jax.ShapeDtypeStruct((Nb, T, bb), jnp.int32)
    cparams = pltpu.CompilerParams(dimension_semantics=("parallel",))

    if return_emissions:
        path_blk, em_flat = pl.pallas_call(
            _locate_subject_kernel_with_em,
            out_shape=(path_shape, jax.ShapeDtypeStruct((C, Nb * N), jnp.float32)),
            grid=(Nb,),
            in_specs=in_specs,
            out_specs=(path_spec, pl.BlockSpec((C, N), lambda i: (0, i))),
            compiler_params=cparams,
        )(x3t, wc_aug, wl_t, crf)
    else:
        path_blk = pl.pallas_call(
            _locate_subject_kernel,
            out_shape=path_shape,
            grid=(Nb,),
            in_specs=in_specs,
            out_specs=path_spec,
            compiler_params=cparams,
        )(x3t, wc_aug, wl_t, crf)

    path = path_blk.transpose(0, 2, 1).reshape(Bp, T)[:B]
    if return_emissions:
        em = (em_flat.reshape(C, Nb, T, bb)
                      .transpose(1, 3, 2, 0)
                      .reshape(Bp, T, C)[:B])
        return path, em
    return path


# ---------------------------------------------------------------------------
# Pure numpy references (same math as the PyTorch module + torchcrf.decode)
# ---------------------------------------------------------------------------
def reference_emissions(x, p):
    B, T, H = x.shape
    pad = np.pad(x, ((0, 0), (1, 1), (0, 0))).astype(np.float32)
    w0 = p["w_conv"][:, :, 0].T
    w1 = p["w_conv"][:, :, 1].T
    w2 = p["w_conv"][:, :, 2].T
    y = pad[:, 0:T] @ w0 + pad[:, 1:T + 1] @ w1 + pad[:, 2:T + 2] @ w2 + p["b_conv"]
    y = np.maximum(y, 0.0)
    return (y @ p["w_lin"].T + p["b_lin"]).astype(np.float32)


def reference_viterbi(em, trans, start, end):
    em = em.astype(np.float32)
    trans = trans.astype(np.float32)
    start = start.astype(np.float32)
    end = end.astype(np.float32)
    B, T, C = em.shape
    paths = np.zeros((B, T), dtype=np.int32)
    for b in range(B):
        score = start + em[b, 0]
        hist = []
        for t in range(1, T):
            vals = score[:, None] + trans                  # (prev, cur)
            hist.append(vals.argmax(axis=0))               # first-occurrence argmax
            score = vals.max(axis=0) + em[b, t]
        score = score + end
        tag = int(np.argmax(score))
        paths[b, T - 1] = tag
        for t in range(T - 2, -1, -1):
            tag = int(hist[t][tag])
            paths[b, t] = tag
    return paths


if __name__ == "__main__":
    B, T, H, C = 2, 8, 32, 4     # batch, seq len, hidden_dim, crf_size (assumed)
    key = jax.random.PRNGKey(0)
    ks = jax.random.split(key, 8)
    params = {
        "w_conv": 0.1 * jax.random.normal(ks[0], (H, H, 3), jnp.float32),
        "b_conv": 0.1 * jax.random.normal(ks[1], (H,), jnp.float32),
        "w_lin": 0.1 * jax.random.normal(ks[2], (C, H), jnp.float32),
        "b_lin": 0.1 * jax.random.normal(ks[3], (C,), jnp.float32),
        "transitions": jax.random.uniform(ks[4], (C, C), jnp.float32, -0.1, 0.1),
        "start_transitions": jax.random.uniform(ks[5], (C,), jnp.float32, -0.1, 0.1),
        "end_transitions": jax.random.uniform(ks[6], (C,), jnp.float32, -0.1, 0.1),
    }
    x = jax.random.normal(ks[7], (B, T, H), jnp.float32)

    # fast default path (no emissions writeback)
    best_path = jax.block_until_ready(locate_subject_forward(x, params))
    # verification path (emissions emitted as a lane-dense slab)
    best_path_v, em = locate_subject_forward(x, params, return_emissions=True)
    best_path_v = jax.block_until_ready(best_path_v)

    np_params = {k: np.asarray(v) for k, v in params.items()}
    em_np = np.asarray(em)

    # 1) conv+linear emissions match the f32 reference to bf16-matmul tolerance
    em_ref = reference_emissions(np.asarray(x), np_params)
    assert np.allclose(em_np, em_ref, rtol=1e-1, atol=1e-1), \
        float(np.abs(em_np - em_ref).max())

    # 2) Viterbi decode matches exactly on the kernel's own (f32) emissions
    ref_path = reference_viterbi(em_np, np_params["transitions"],
                                 np_params["start_transitions"],
                                 np_params["end_transitions"])
    assert np.array_equal(np.asarray(best_path_v), ref_path), \
        (np.asarray(best_path_v), ref_path)

    # 3) fast path (no em output) agrees with the verification path
    assert np.array_equal(np.asarray(best_path), np.asarray(best_path_v))

    print("KERNEL_OK")
</pallas_src>

<mosaic_0001>
module attributes {stable_mosaic.version = 11 : i64} {
  func.func @_locate_subject_kernel(%arg0: i32, %arg1: memref<97x128xbf16, #tpu.memory_space<vmem>>, %arg2: memref<32x97xbf16, #tpu.memory_space<vmem>>, %arg3: memref<4x32xbf16, #tpu.memory_space<vmem>>, %arg4: memref<4x7xf32, #tpu.memory_space<vmem>>, %arg5: memref<1x8x16xi32, #tpu.memory_space<vmem>>) attributes {dimension_semantics = [#tpu.dimension_semantics<parallel>], iteration_bounds = array<i64: 1>, scalar_prefetch = 0 : i64, scratch_operands = 0 : i64, tpu.core_type = #tpu.core_type<tc>, window_params = [{transform_indices = @transform_0, window_bounds = array<i64: 97, 128>}, {pipeline_mode = #tpu.pipeline_mode<synchronous>, transform_indices = @transform_1, window_bounds = array<i64: 32, 97>}, {pipeline_mode = #tpu.pipeline_mode<synchronous>, transform_indices = @transform_2, window_bounds = array<i64: 4, 32>}, {pipeline_mode = #tpu.pipeline_mode<synchronous>, transform_indices = @transform_3, window_bounds = array<i64: 4, 7>}, {transform_indices = @transform_4, window_bounds = array<i64: 1, 8, 16>}]} {
    %c0 = arith.constant 0 : index
    %c0_0 = arith.constant 0 : index
    %0 = vector.load %arg2[%c0, %c0_0] : memref<32x97xbf16, #tpu.memory_space<vmem>>, vector<32x97xbf16>
    %c0_1 = arith.constant 0 : index
    %c0_2 = arith.constant 0 : index
    %1 = vector.load %arg1[%c0_1, %c0_2] : memref<97x128xbf16, #tpu.memory_space<vmem>>, vector<97x128xbf16>
    %cst = arith.constant dense<0.000000e+00> : vector<32x128xf32>
    %2 = tpu.matmul %0, %1, %cst {dimension_numbers = #tpu.dot_dimension_numbers<[1], [0], [0], [1], [0, 0, 1, 1], [], []>} : vector<32x97xbf16>, vector<97x128xbf16>, vector<32x128xf32> -> vector<32x128xf32>
    %cst_3 = arith.constant 0.000000e+00 : f32
    %3 = vector.broadcast %cst_3 : f32 to vector<32x128xf32>
    %4 = arith.maximumf %2, %3 : vector<32x128xf32>
    %c0_4 = arith.constant 0 : index
    %c0_5 = arith.constant 0 : index
    %5 = vector.load %arg3[%c0_4, %c0_5] : memref<4x32xbf16, #tpu.memory_space<vmem>>, vector<4x32xbf16>
    %6 = arith.truncf %4 : vector<32x128xf32> to vector<32x128xbf16>
    %cst_6 = arith.constant dense<0.000000e+00> : vector<4x128xf32>
    %7 = tpu.matmul %5, %6, %cst_6 {dimension_numbers = #tpu.dot_dimension_numbers<[1], [0], [0], [1], [0, 0, 1, 1], [], []>} : vector<4x32xbf16>, vector<32x128xbf16>, vector<4x128xf32> -> vector<4x128xf32>
    %c0_7 = arith.constant 0 : index
    %c0_8 = arith.constant 0 : index
    %8 = vector.load %arg4[%c0_7, %c0_8] : memref<4x7xf32, #tpu.memory_space<vmem>>, vector<4x7xf32>
    %9 = vector.extract_strided_slice %8 {offsets = [0, 0], sizes = [4, 1], strides = [1, 1]} : vector<4x7xf32> to vector<4x1xf32>
    %10 = vector.extract_strided_slice %8 {offsets = [0, 1], sizes = [4, 1], strides = [1, 1]} : vector<4x7xf32> to vector<4x1xf32>
    %11 = vector.extract_strided_slice %8 {offsets = [0, 2], sizes = [4, 1], strides = [1, 1]} : vector<4x7xf32> to vector<4x1xf32>
    %12 = vector.extract_strided_slice %8 {offsets = [0, 3], sizes = [4, 1], strides = [1, 1]} : vector<4x7xf32> to vector<4x1xf32>
    %13 = vector.extract_strided_slice %8 {offsets = [0, 4], sizes = [4, 1], strides = [1, 1]} : vector<4x7xf32> to vector<4x1xf32>
    %14 = vector.extract_strided_slice %8 {offsets = [0, 5], sizes = [4, 1], strides = [1, 1]} : vector<4x7xf32> to vector<4x1xf32>
    %15 = vector.extract_strided_slice %8 {offsets = [0, 6], sizes = [4, 1], strides = [1, 1]} : vector<4x7xf32> to vector<4x1xf32>
    %16 = vector.broadcast %13 : vector<4x1xf32> to vector<4x128xf32>
    %17 = arith.addf %7, %16 : vector<4x128xf32>
    %18 = vector.extract_strided_slice %17 {offsets = [0, 0], sizes = [4, 16], strides = [1, 1]} : vector<4x128xf32> to vector<4x16xf32>
    %19 = vector.broadcast %14 : vector<4x1xf32> to vector<4x16xf32>
    %20 = arith.addf %19, %18 : vector<4x16xf32>
    %21 = vector.extract_strided_slice %20 {offsets = [0, 0], sizes = [1, 16], strides = [1, 1]} : vector<4x16xf32> to vector<1x16xf32>
    %22 = vector.broadcast %21 : vector<1x16xf32> to vector<4x16xf32>
    %23 = vector.broadcast %9 : vector<4x1xf32> to vector<4x16xf32>
    %24 = arith.addf %22, %23 : vector<4x16xf32>
    %c0_i32 = arith.constant 0 : i32
    %25 = vector.broadcast %c0_i32 : i32 to vector<4x16xi32>
    %26 = vector.extract_strided_slice %20 {offsets = [1, 0], sizes = [1, 16], strides = [1, 1]} : vector<4x16xf32> to vector<1x16xf32>
    %27 = vector.broadcast %26 : vector<1x16xf32> to vector<4x16xf32>
    %28 = vector.broadcast %10 : vector<4x1xf32> to vector<4x16xf32>
    %29 = arith.addf %27, %28 : vector<4x16xf32>
    %30 = arith.cmpf ogt, %29, %24 : vector<4x16xf32>
    %c1_i32 = arith.constant 1 : i32
    %31 = vector.broadcast %c1_i32 : i32 to vector<4x16xi32>
    %32 = arith.select %30, %31, %25 : vector<4x16xi1>, vector<4x16xi32>
    %33 = arith.maximumf %24, %29 : vector<4x16xf32>
    %34 = vector.extract_strided_slice %20 {offsets = [2, 0], sizes = [1, 16], strides = [1, 1]} : vector<4x16xf32> to vector<1x16xf32>
    %35 = vector.broadcast %34 : vector<1x16xf32> to vector<4x16xf32>
    %36 = vector.broadcast %11 : vector<4x1xf32> to vector<4x16xf32>
    %37 = arith.addf %35, %36 : vector<4x16xf32>
    %38 = arith.cmpf ogt, %37, %33 : vector<4x16xf32>
    %c2_i32 = arith.constant 2 : i32
    %39 = vector.broadcast %c2_i32 : i32 to vector<4x16xi32>
    %40 = arith.select %38, %39, %32 : vector<4x16xi1>, vector<4x16xi32>
    %41 = arith.maximumf %33, %37 : vector<4x16xf32>
    %42 = vector.extract_strided_slice %20 {offsets = [3, 0], sizes = [1, 16], strides = [1, 1]} : vector<4x16xf32> to vector<1x16xf32>
    %43 = vector.broadcast %42 : vector<1x16xf32> to vector<4x16xf32>
    %44 = vector.broadcast %12 : vector<4x1xf32> to vector<4x16xf32>
    %45 = arith.addf %43, %44 : vector<4x16xf32>
    %46 = arith.cmpf ogt, %45, %41 : vector<4x16xf32>
    %c3_i32 = arith.constant 3 : i32
    %47 = vector.broadcast %c3_i32 : i32 to vector<4x16xi32>
    %48 = arith.select %46, %47, %40 : vector<4x16xi1>, vector<4x16xi32>
    %49 = arith.maximumf %41, %45 : vector<4x16xf32>
    %50 = vector.extract_strided_slice %17 {offsets = [0, 16], sizes = [4, 16], strides = [1, 1]} : vector<4x128xf32> to vector<4x16xf32>
    %51 = arith.addf %49, %50 : vector<4x16xf32>
    %52 = vector.extract_strided_slice %51 {offsets = [0, 0], sizes = [1, 16], strides = [1, 1]} : vector<4x16xf32> to vector<1x16xf32>
    %53 = vector.broadcast %52 : vector<1x16xf32> to vector<4x16xf32>
    %54 = vector.broadcast %9 : vector<4x1xf32> to vector<4x16xf32>
    %55 = arith.addf %53, %54 : vector<4x16xf32>
    %c0_i32_9 = arith.constant 0 : i32
    %56 = vector.broadcast %c0_i32_9 : i32 to vector<4x16xi32>
    %57 = vector.extract_strided_slice %51 {offsets = [1, 0], sizes = [1, 16], strides = [1, 1]} : vector<4x16xf32> to vector<1x16xf32>
    %58 = vector.broadcast %57 : vector<1x16xf32> to vector<4x16xf32>
    %59 = vector.broadcast %10 : vector<4x1xf32> to vector<4x16xf32>
    %60 = arith.addf %58, %59 : vector<4x16xf32>
    %61 = arith.cmpf ogt, %60, %55 : vector<4x16xf32>
    %c1_i32_10 = arith.constant 1 : i32
    %62 = vector.broadcast %c1_i32_10 : i32 to vector<4x16xi32>
    %63 = arith.select %61, %62, %56 : vector<4x16xi1>, vector<4x16xi32>
    %64 = arith.maximumf %55, %60 : vector<4x16xf32>
    %65 = vector.extract_strided_slice %51 {offsets = [2, 0], sizes = [1, 16], strides = [1, 1]} : vector<4x16xf32> to vector<1x16xf32>
    %66 = vector.broadcast %65 : vector<1x16xf32> to vector<4x16xf32>
    %67 = vector.broadcast %11 : vector<4x1xf32> to vector<4x16xf32>
    %68 = arith.addf %66, %67 : vector<4x16xf32>
    %69 = arith.cmpf ogt, %68, %64 : vector<4x16xf32>
    %c2_i32_11 = arith.constant 2 : i32
    %70 = vector.broadcast %c2_i32_11 : i32 to vector<4x16xi32>
    %71 = arith.select %69, %70, %63 : vector<4x16xi1>, vector<4x16xi32>
    %72 = arith.maximumf %64, %68 : vector<4x16xf32>
    %73 = vector.extract_strided_slice %51 {offsets = [3, 0], sizes = [1, 16], strides = [1, 1]} : vector<4x16xf32> to vector<1x16xf32>
    %74 = vector.broadcast %73 : vector<1x16xf32> to vector<4x16xf32>
    %75 = vector.broadcast %12 : vector<4x1xf32> to vector<4x16xf32>
    %76 = arith.addf %74, %75 : vector<4x16xf32>
    %77 = arith.cmpf ogt, %76, %72 : vector<4x16xf32>
    %c3_i32_12 = arith.constant 3 : i32
    %78 = vector.broadcast %c3_i32_12 : i32 to vector<4x16xi32>
    %79 = arith.select %77, %78, %71 : vector<4x16xi1>, vector<4x16xi32>
    %80 = arith.maximumf %72, %76 : vector<4x16xf32>
    %81 = vector.extract_strided_slice %17 {offsets = [0, 32], sizes = [4, 16], strides = [1, 1]} : vector<4x128xf32> to vector<4x16xf32>
    %82 = arith.addf %80, %81 : vector<4x16xf32>
    %83 = vector.extract_strided_slice %82 {offsets = [0, 0], sizes = [1, 16], strides = [1, 1]} : vector<4x16xf32> to vector<1x16xf32>
    %84 = vector.broadcast %83 : vector<1x16xf32> to vector<4x16xf32>
    %85 = vector.broadcast %9 : vector<4x1xf32> to vector<4x16xf32>
    %86 = arith.addf %84, %85 : vector<4x16xf32>
    %c0_i32_13 = arith.constant 0 : i32
    %87 = vector.broadcast %c0_i32_13 : i32 to vector<4x16xi32>
    %88 = vector.extract_strided_slice %82 {offsets = [1, 0], sizes = [1, 16], strides = [1, 1]} : vector<4x16xf32> to vector<1x16xf32>
    %89 = vector.broadcast %88 : vector<1x16xf32> to vector<4x16xf32>
    %90 = vector.broadcast %10 : vector<4x1xf32> to vector<4x16xf32>
    %91 = arith.addf %89, %90 : vector<4x16xf32>
    %92 = arith.cmpf ogt, %91, %86 : vector<4x16xf32>
    %c1_i32_14 = arith.constant 1 : i32
    %93 = vector.broadcast %c1_i32_14 : i32 to vector<4x16xi32>
    %94 = arith.select %92, %93, %87 : vector<4x16xi1>, vector<4x16xi32>
    %95 = arith.maximumf %86, %91 : vector<4x16xf32>
    %96 = vector.extract_strided_slice %82 {offsets = [2, 0], sizes = [1, 16], strides = [1, 1]} : vector<4x16xf32> to vector<1x16xf32>
    %97 = vector.broadcast %96 : vector<1x16xf32> to vector<4x16xf32>
    %98 = vector.broadcast %11 : vector<4x1xf32> to vector<4x16xf32>
    %99 = arith.addf %97, %98 : vector<4x16xf32>
    %100 = arith.cmpf ogt, %99, %95 : vector<4x16xf32>
    %c2_i32_15 = arith.constant 2 : i32
    %101 = vector.broadcast %c2_i32_15 : i32 to vector<4x16xi32>
    %102 = arith.select %100, %101, %94 : vector<4x16xi1>, vector<4x16xi32>
    %103 = arith.maximumf %95, %99 : vector<4x16xf32>
    %104 = vector.extract_strided_slice %82 {offsets = [3, 0], sizes = [1, 16], strides = [1, 1]} : vector<4x16xf32> to vector<1x16xf32>
    %105 = vector.broadcast %104 : vector<1x16xf32> to vector<4x16xf32>
    %106 = vector.broadcast %12 : vector<4x1xf32> to vector<4x16xf32>
    %107 = arith.addf %105, %106 : vector<4x16xf32>
    %108 = arith.cmpf ogt, %107, %103 : vector<4x16xf32>
    %c3_i32_16 = arith.constant 3 : i32
    %109 = vector.broadcast %c3_i32_16 : i32 to vector<4x16xi32>
    %110 = arith.select %108, %109, %102 : vector<4x16xi1>, vector<4x16xi32>
    %111 = arith.maximumf %103, %107 : vector<4x16xf32>
    %112 = vector.extract_strided_slice %17 {offsets = [0, 48], sizes = [4, 16], strides = [1, 1]} : vector<4x128xf32> to vector<4x16xf32>
    %113 = arith.addf %111, %112 : vector<4x16xf32>
    %114 = vector.extract_strided_slice %113 {offsets = [0, 0], sizes = [1, 16], strides = [1, 1]} : vector<4x16xf32> to vector<1x16xf32>
    %115 = vector.broadcast %114 : vector<1x16xf32> to vector<4x16xf32>
    %116 = vector.broadcast %9 : vector<4x1xf32> to vector<4x16xf32>
    %117 = arith.addf %115, %116 : vector<4x16xf32>
    %c0_i32_17 = arith.constant 0 : i32
    %118 = vector.broadcast %c0_i32_17 : i32 to vector<4x16xi32>
    %119 = vector.extract_strided_slice %113 {offsets = [1, 0], sizes = [1, 16], strides = [1, 1]} : vector<4x16xf32> to vector<1x16xf32>
    %120 = vector.broadcast %119 : vector<1x16xf32> to vector<4x16xf32>
    %121 = vector.broadcast %10 : vector<4x1xf32> to vector<4x16xf32>
    %122 = arith.addf %120, %121 : vector<4x16xf32>
    %123 = arith.cmpf ogt, %122, %117 : vector<4x16xf32>
    %c1_i32_18 = arith.constant 1 : i32
    %124 = vector.broadcast %c1_i32_18 : i32 to vector<4x16xi32>
    %125 = arith.select %123, %124, %118 : vector<4x16xi1>, vector<4x16xi32>
    %126 = arith.maximumf %117, %122 : vector<4x16xf32>
    %127 = vector.extract_strided_slice %113 {offsets = [2, 0], sizes = [1, 16], strides = [1, 1]} : vector<4x16xf32> to vector<1x16xf32>
    %128 = vector.broadcast %127 : vector<1x16xf32> to vector<4x16xf32>
    %129 = vector.broadcast %11 : vector<4x1xf32> to vector<4x16xf32>
    %130 = arith.addf %128, %129 : vector<4x16xf32>
    %131 = arith.cmpf ogt, %130, %126 : vector<4x16xf32>
    %c2_i32_19 = arith.constant 2 : i32
    %132 = vector.broadcast %c2_i32_19 : i32 to vector<4x16xi32>
    %133 = arith.select %131, %132, %125 : vector<4x16xi1>, vector<4x16xi32>
    %134 = arith.maximumf %126, %130 : vector<4x16xf32>
    %135 = vector.extract_strided_slice %113 {offsets = [3, 0], sizes = [1, 16], strides = [1, 1]} : vector<4x16xf32> to vector<1x16xf32>
    %136 = vector.broadcast %135 : vector<1x16xf32> to vector<4x16xf32>
    %137 = vector.broadcast %12 : vector<4x1xf32> to vector<4x16xf32>
    %138 = arith.addf %136, %137 : vector<4x16xf32>
    %139 = arith.cmpf ogt, %138, %134 : vector<4x16xf32>
    %c3_i32_20 = arith.constant 3 : i32
    %140 = vector.broadcast %c3_i32_20 : i32 to vector<4x16xi32>
    %141 = arith.select %139, %140, %133 : vector<4x16xi1>, vector<4x16xi32>
    %142 = arith.maximumf %134, %138 : vector<4x16xf32>
    %143 = vector.extract_strided_slice %17 {offsets = [0, 64], sizes = [4, 16], strides = [1, 1]} : vector<4x128xf32> to vector<4x16xf32>
    %144 = arith.addf %142, %143 : vector<4x16xf32>
    %145 = vector.extract_strided_slice %144 {offsets = [0, 0], sizes = [1, 16], strides = [1, 1]} : vector<4x16xf32> to vector<1x16xf32>
    %146 = vector.broadcast %145 : vector<1x16xf32> to vector<4x16xf32>
    %147 = vector.broadcast %9 : vector<4x1xf32> to vector<4x16xf32>
    %148 = arith.addf %146, %147 : vector<4x16xf32>
    %c0_i32_21 = arith.constant 0 : i32
    %149 = vector.broadcast %c0_i32_21 : i32 to vector<4x16xi32>
    %150 = vector.extract_strided_slice %144 {offsets = [1, 0], sizes = [1, 16], strides = [1, 1]} : vector<4x16xf32> to vector<1x16xf32>
    %151 = vector.broadcast %150 : vector<1x16xf32> to vector<4x16xf32>
    %152 = vector.broadcast %10 : vector<4x1xf32> to vector<4x16xf32>
    %153 = arith.addf %151, %152 : vector<4x16xf32>
    %154 = arith.cmpf ogt, %153, %148 : vector<4x16xf32>
    %c1_i32_22 = arith.constant 1 : i32
    %155 = vector.broadcast %c1_i32_22 : i32 to vector<4x16xi32>
    %156 = arith.select %154, %155, %149 : vector<4x16xi1>, vector<4x16xi32>
    %157 = arith.maximumf %148, %153 : vector<4x16xf32>
    %158 = vector.extract_strided_slice %144 {offsets = [2, 0], sizes = [1, 16], strides = [1, 1]} : vector<4x16xf32> to vector<1x16xf32>
    %159 = vector.broadcast %158 : vector<1x16xf32> to vector<4x16xf32>
    %160 = vector.broadcast %11 : vector<4x1xf32> to vector<4x16xf32>
    %161 = arith.addf %159, %160 : vector<4x16xf32>
    %162 = arith.cmpf ogt, %161, %157 : vector<4x16xf32>
    %c2_i32_23 = arith.constant 2 : i32
    %163 = vector.broadcast %c2_i32_23 : i32 to vector<4x16xi32>
    %164 = arith.select %162, %163, %156 : vector<4x16xi1>, vector<4x16xi32>
    %165 = arith.maximumf %157, %161 : vector<4x16xf32>
    %166 = vector.extract_strided_slice %144 {offsets = [3, 0], sizes = [1, 16], strides = [1, 1]} : vector<4x16xf32> to vector<1x16xf32>
    %167 = vector.broadcast %166 : vector<1x16xf32> to vector<4x16xf32>
    %168 = vector.broadcast %12 : vector<4x1xf32> to vector<4x16xf32>
    %169 = arith.addf %167, %168 : vector<4x16xf32>
    %170 = arith.cmpf ogt, %169, %165 : vector<4x16xf32>
    %c3_i32_24 = arith.constant 3 : i32
    %171 = vector.broadcast %c3_i32_24 : i32 to vector<4x16xi32>
    %172 = arith.select %170, %171, %164 : vector<4x16xi1>, vector<4x16xi32>
    %173 = arith.maximumf %165, %169 : vector<4x16xf32>
    %174 = vector.extract_strided_slice %17 {offsets = [0, 80], sizes = [4, 16], strides = [1, 1]} : vector<4x128xf32> to vector<4x16xf32>
    %175 = arith.addf %173, %174 : vector<4x16xf32>
    %176 = vector.extract_strided_slice %175 {offsets = [0, 0], sizes = [1, 16], strides = [1, 1]} : vector<4x16xf32> to vector<1x16xf32>
    %177 = vector.broadcast %176 : vector<1x16xf32> to vector<4x16xf32>
    %178 = vector.broadcast %9 : vector<4x1xf32> to vector<4x16xf32>
    %179 = arith.addf %177, %178 : vector<4x16xf32>
    %c0_i32_25 = arith.constant 0 : i32
    %180 = vector.broadcast %c0_i32_25 : i32 to vector<4x16xi32>
    %181 = vector.extract_strided_slice %175 {offsets = [1, 0], sizes = [1, 16], strides = [1, 1]} : vector<4x16xf32> to vector<1x16xf32>
    %182 = vector.broadcast %181 : vector<1x16xf32> to vector<4x16xf32>
    %183 = vector.broadcast %10 : vector<4x1xf32> to vector<4x16xf32>
    %184 = arith.addf %182, %183 : vector<4x16xf32>
    %185 = arith.cmpf ogt, %184, %179 : vector<4x16xf32>
    %c1_i32_26 = arith.constant 1 : i32
    %186 = vector.broadcast %c1_i32_26 : i32 to vector<4x16xi32>
    %187 = arith.select %185, %186, %180 : vector<4x16xi1>, vector<4x16xi32>
    %188 = arith.maximumf %179, %184 : vector<4x16xf32>
    %189 = vector.extract_strided_slice %175 {offsets = [2, 0], sizes = [1, 16], strides = [1, 1]} : vector<4x16xf32> to vector<1x16xf32>
    %190 = vector.broadcast %189 : vector<1x16xf32> to vector<4x16xf32>
    %191 = vector.broadcast %11 : vector<4x1xf32> to vector<4x16xf32>
    %192 = arith.addf %190, %191 : vector<4x16xf32>
    %193 = arith.cmpf ogt, %192, %188 : vector<4x16xf32>
    %c2_i32_27 = arith.constant 2 : i32
    %194 = vector.broadcast %c2_i32_27 : i32 to vector<4x16xi32>
    %195 = arith.select %193, %194, %187 : vector<4x16xi1>, vector<4x16xi32>
    %196 = arith.maximumf %188, %192 : vector<4x16xf32>
    %197 = vector.extract_strided_slice %175 {offsets = [3, 0], sizes = [1, 16], strides = [1, 1]} : vector<4x16xf32> to vector<1x16xf32>
    %198 = vector.broadcast %197 : vector<1x16xf32> to vector<4x16xf32>
    %199 = vector.broadcast %12 : vector<4x1xf32> to vector<4x16xf32>
    %200 = arith.addf %198, %199 : vector<4x16xf32>
    %201 = arith.cmpf ogt, %200, %196 : vector<4x16xf32>
    %c3_i32_28 = arith.constant 3 : i32
    %202 = vector.broadcast %c3_i32_28 : i32 to vector<4x16xi32>
    %203 = arith.select %201, %202, %195 : vector<4x16xi1>, vector<4x16xi32>
    %204 = arith.maximumf %196, %200 : vector<4x16xf32>
    %205 = vector.extract_strided_slice %17 {offsets = [0, 96], sizes = [4, 16], strides = [1, 1]} : vector<4x128xf32> to vector<4x16xf32>
    %206 = arith.addf %204, %205 : vector<4x16xf32>
    %207 = vector.extract_strided_slice %206 {offsets = [0, 0], sizes = [1, 16], strides = [1, 1]} : vector<4x16xf32> to vector<1x16xf32>
    %208 = vector.broadcast %207 : vector<1x16xf32> to vector<4x16xf32>
    %209 = vector.broadcast %9 : vector<4x1xf32> to vector<4x16xf32>
    %210 = arith.addf %208, %209 : vector<4x16xf32>
    %c0_i32_29 = arith.constant 0 : i32
    %211 = vector.broadcast %c0_i32_29 : i32 to vector<4x16xi32>
    %212 = vector.extract_strided_slice %206 {offsets = [1, 0], sizes = [1, 16], strides = [1, 1]} : vector<4x16xf32> to vector<1x16xf32>
    %213 = vector.broadcast %212 : vector<1x16xf32> to vector<4x16xf32>
    %214 = vector.broadcast %10 : vector<4x1xf32> to vector<4x16xf32>
    %215 = arith.addf %213, %214 : vector<4x16xf32>
    %216 = arith.cmpf ogt, %215, %210 : vector<4x16xf32>
    %c1_i32_30 = arith.constant 1 : i32
    %217 = vector.broadcast %c1_i32_30 : i32 to vector<4x16xi32>
    %218 = arith.select %216, %217, %211 : vector<4x16xi1>, vector<4x16xi32>
    %219 = arith.maximumf %210, %215 : vector<4x16xf32>
    %220 = vector.extract_strided_slice %206 {offsets = [2, 0], sizes = [1, 16], strides = [1, 1]} : vector<4x16xf32> to vector<1x16xf32>
    %221 = vector.broadcast %220 : vector<1x16xf32> to vector<4x16xf32>
    %222 = vector.broadcast %11 : vector<4x1xf32> to vector<4x16xf32>
    %223 = arith.addf %221, %222 : vector<4x16xf32>
    %224 = arith.cmpf ogt, %223, %219 : vector<4x16xf32>
    %c2_i32_31 = arith.constant 2 : i32
    %225 = vector.broadcast %c2_i32_31 : i32 to vector<4x16xi32>
    %226 = arith.select %224, %225, %218 : vector<4x16xi1>, vector<4x16xi32>
    %227 = arith.maximumf %219, %223 : vector<4x16xf32>
    %228 = vector.extract_strided_slice %206 {offsets = [3, 0], sizes = [1, 16], strides = [1, 1]} : vector<4x16xf32> to vector<1x16xf32>
    %229 = vector.broadcast %228 : vector<1x16xf32> to vector<4x16xf32>
    %230 = vector.broadcast %12 : vector<4x1xf32> to vector<4x16xf32>
    %231 = arith.addf %229, %230 : vector<4x16xf32>
    %232 = arith.cmpf ogt, %231, %227 : vector<4x16xf32>
    %c3_i32_32 = arith.constant 3 : i32
    %233 = vector.broadcast %c3_i32_32 : i32 to vector<4x16xi32>
    %234 = arith.select %232, %233, %226 : vector<4x16xi1>, vector<4x16xi32>
    %235 = arith.maximumf %227, %231 : vector<4x16xf32>
    %236 = vector.extract_strided_slice %17 {offsets = [0, 112], sizes = [4, 16], strides = [1, 1]} : vector<4x128xf32> to vector<4x16xf32>
    %237 = arith.addf %235, %236 : vector<4x16xf32>
    %238 = vector.broadcast %15 : vector<4x1xf32> to vector<4x16xf32>
    %239 = arith.addf %237, %238 : vector<4x16xf32>
    %240 = vector.extract_strided_slice %239 {offsets = [0, 0], sizes = [1, 16], strides = [1, 1]} : vector<4x16xf32> to vector<1x16xf32>
    %c0_i32_33 = arith.constant 0 : i32
    %241 = vector.broadcast %c0_i32_33 : i32 to vector<1x16xi32>
    %242 = vector.extract_strided_slice %239 {offsets = [1, 0], sizes = [1, 16], strides = [1, 1]} : vector<4x16xf32> to vector<1x16xf32>
    %243 = arith.cmpf ogt, %242, %240 : vector<1x16xf32>
    %c1_i32_34 = arith.constant 1 : i32
    %244 = vector.broadcast %c1_i32_34 : i32 to vector<1x16xi32>
    %245 = arith.select %243, %244, %241 : vector<1x16xi1>, vector<1x16xi32>
    %246 = arith.maximumf %240, %242 : vector<1x16xf32>
    %247 = vector.extract_strided_slice %239 {offsets = [2, 0], sizes = [1, 16], strides = [1, 1]} : vector<4x16xf32> to vector<1x16xf32>
    %248 = arith.cmpf ogt, %247, %246 : vector<1x16xf32>
    %c2_i32_35 = arith.constant 2 : i32
    %249 = vector.broadcast %c2_i32_35 : i32 to vector<1x16xi32>
    %250 = arith.select %248, %249, %245 : vector<1x16xi1>, vector<1x16xi32>
    %251 = arith.maximumf %246, %247 : vector<1x16xf32>
    %252 = vector.extract_strided_slice %239 {offsets = [3, 0], sizes = [1, 16], strides = [1, 1]} : vector<4x16xf32> to vector<1x16xf32>
    %253 = arith.cmpf ogt, %252, %251 : vector<1x16xf32>
    %c3_i32_36 = arith.constant 3 : i32
    %254 = vector.broadcast %c3_i32_36 : i32 to vector<1x16xi32>
    %255 = arith.select %253, %254, %250 : vector<1x16xi1>, vector<1x16xi32>
    %256 = tpu.iota {dimensions = array<i32: 0>} : vector<8x16xi32>
    %c7_i32 = arith.constant 7 : i32
    %257 = vector.broadcast %c7_i32 : i32 to vector<8x16xi32>
    %258 = arith.cmpi eq, %256, %257 : vector<8x16xi32>
    %c0_i32_37 = arith.constant 0 : i32
    %259 = vector.shape_cast %255 : vector<1x16xi32> to vector<1x16xi32>
    %260 = vector.broadcast %259 : vector<1x16xi32> to vector<8x16xi32>
    %261 = vector.broadcast %c0_i32_37 : i32 to vector<8x16xi32>
    %262 = arith.select %258, %260, %261 : vector<8x16xi1>, vector<8x16xi32>
    %263 = vector.extract_strided_slice %234 {offsets = [0, 0], sizes = [1, 16], strides = [1, 1]} : vector<4x16xi32> to vector<1x16xi32>
    %c1_i32_38 = arith.constant 1 : i32
    %264 = vector.broadcast %c1_i32_38 : i32 to vector<1x16xi32>
    %265 = arith.cmpi eq, %255, %264 : vector<1x16xi32>
    %266 = vector.extract_strided_slice %234 {offsets = [1, 0], sizes = [1, 16], strides = [1, 1]} : vector<4x16xi32> to vector<1x16xi32>
    %267 = arith.select %265, %266, %263 : vector<1x16xi1>, vector<1x16xi32>
    %c2_i32_39 = arith.constant 2 : i32
    %268 = vector.broadcast %c2_i32_39 : i32 to vector<1x16xi32>
    %269 = arith.cmpi eq, %255, %268 : vector<1x16xi32>
    %270 = vector.extract_strided_slice %234 {offsets = [2, 0], sizes = [1, 16], strides = [1, 1]} : vector<4x16xi32> to vector<1x16xi32>
    %271 = arith.select %269, %270, %267 : vector<1x16xi1>, vector<1x16xi32>
    %c3_i32_40 = arith.constant 3 : i32
    %272 = vector.broadcast %c3_i32_40 : i32 to vector<1x16xi32>
    %273 = arith.cmpi eq, %255, %272 : vector<1x16xi32>
    %274 = vector.extract_strided_slice %234 {offsets = [3, 0], sizes = [1, 16], strides = [1, 1]} : vector<4x16xi32> to vector<1x16xi32>
    %275 = arith.select %273, %274, %271 : vector<1x16xi1>, vector<1x16xi32>
    %c6_i32 = arith.constant 6 : i32
    %276 = vector.broadcast %c6_i32 : i32 to vector<8x16xi32>
    %277 = arith.cmpi eq, %256, %276 : vector<8x16xi32>
    %278 = vector.shape_cast %275 : vector<1x16xi32> to vector<1x16xi32>
    %279 = vector.broadcast %278 : vector<1x16xi32> to vector<8x16xi32>
    %280 = arith.select %277, %279, %262 : vector<8x16xi1>, vector<8x16xi32>
    %281 = vector.extract_strided_slice %203 {offsets = [0, 0], sizes = [1, 16], strides = [1, 1]} : vector<4x16xi32> to vector<1x16xi32>
    %c1_i32_41 = arith.constant 1 : i32
    %282 = vector.broadcast %c1_i32_41 : i32 to vector<1x16xi32>
    %283 = arith.cmpi eq, %275, %282 : vector<1x16xi32>
    %284 = vector.extract_strided_slice %203 {offsets = [1, 0], sizes = [1, 16], strides = [1, 1]} : vector<4x16xi32> to vector<1x16xi32>
    %285 = arith.select %283, %284, %281 : vector<1x16xi1>, vector<1x16xi32>
    %c2_i32_42 = arith.constant 2 : i32
    %286 = vector.broadcast %c2_i32_42 : i32 to vector<1x16xi32>
    %287 = arith.cmpi eq, %275, %286 : vector<1x16xi32>
    %288 = vector.extract_strided_slice %203 {offsets = [2, 0], sizes = [1, 16], strides = [1, 1]} : vector<4x16xi32> to vector<1x16xi32>
    %289 = arith.select %287, %288, %285 : vector<1x16xi1>, vector<1x16xi32>
    %c3_i32_43 = arith.constant 3 : i32
    %290 = vector.broadcast %c3_i32_43 : i32 to vector<1x16xi32>
    %291 = arith.cmpi eq, %275, %290 : vector<1x16xi32>
    %292 = vector.extract_strided_slice %203 {offsets = [3, 0], sizes = [1, 16], strides = [1, 1]} : vector<4x16xi32> to vector<1x16xi32>
    %293 = arith.select %291, %292, %289 : vector<1x16xi1>, vector<1x16xi32>
    %c5_i32 = arith.constant 5 : i32
    %294 = vector.broadcast %c5_i32 : i32 to vector<8x16xi32>
    %295 = arith.cmpi eq, %256, %294 : vector<8x16xi32>
    %296 = vector.shape_cast %293 : vector<1x16xi32> to vector<1x16xi32>
    %297 = vector.broadcast %296 : vector<1x16xi32> to vector<8x16xi32>
    %298 = arith.select %295, %297, %280 : vector<8x16xi1>, vector<8x16xi32>
    %299 = vector.extract_strided_slice %172 {offsets = [0, 0], sizes = [1, 16], strides = [1, 1]} : vector<4x16xi32> to vector<1x16xi32>
    %c1_i32_44 = arith.constant 1 : i32
    %300 = vector.broadcast %c1_i32_44 : i32 to vector<1x16xi32>
    %301 = arith.cmpi eq, %293, %300 : vector<1x16xi32>
    %302 = vector.extract_strided_slice %172 {offsets = [1, 0], sizes = [1, 16], strides = [1, 1]} : vector<4x16xi32> to vector<1x16xi32>
    %303 = arith.select %301, %302, %299 : vector<1x16xi1>, vector<1x16xi32>
    %c2_i32_45 = arith.constant 2 : i32
    %304 = vector.broadcast %c2_i32_45 : i32 to vector<1x16xi32>
    %305 = arith.cmpi eq, %293, %304 : vector<1x16xi32>
    %306 = vector.extract_strided_slice %172 {offsets = [2, 0], sizes = [1, 16], strides = [1, 1]} : vector<4x16xi32> to vector<1x16xi32>
    %307 = arith.select %305, %306, %303 : vector<1x16xi1>, vector<1x16xi32>
    %c3_i32_46 = arith.constant 3 : i32
    %308 = vector.broadcast %c3_i32_46 : i32 to vector<1x16xi32>
    %309 = arith.cmpi eq, %293, %308 : vector<1x16xi32>
    %310 = vector.extract_strided_slice %172 {offsets = [3, 0], sizes = [1, 16], strides = [1, 1]} : vector<4x16xi32> to vector<1x16xi32>
    %311 = arith.select %309, %310, %307 : vector<1x16xi1>, vector<1x16xi32>
    %c4_i32 = arith.constant 4 : i32
    %312 = vector.broadcast %c4_i32 : i32 to vector<8x16xi32>
    %313 = arith.cmpi eq, %256, %312 : vector<8x16xi32>
    %314 = vector.shape_cast %311 : vector<1x16xi32> to vector<1x16xi32>
    %315 = vector.broadcast %314 : vector<1x16xi32> to vector<8x16xi32>
    %316 = arith.select %313, %315, %298 : vector<8x16xi1>, vector<8x16xi32>
    %317 = vector.extract_strided_slice %141 {offsets = [0, 0], sizes = [1, 16], strides = [1, 1]} : vector<4x16xi32> to vector<1x16xi32>
    %c1_i32_47 = arith.constant 1 : i32
    %318 = vector.broadcast %c1_i32_47 : i32 to vector<1x16xi32>
    %319 = arith.cmpi eq, %311, %318 : vector<1x16xi32>
    %320 = vector.extract_strided_slice %141 {offsets = [1, 0], sizes = [1, 16], strides = [1, 1]} : vector<4x16xi32> to vector<1x16xi32>
    %321 = arith.select %319, %320, %317 : vector<1x16xi1>, vector<1x16xi32>
    %c2_i32_48 = arith.constant 2 : i32
    %322 = vector.broadcast %c2_i32_48 : i32 to vector<1x16xi32>
    %323 = arith.cmpi eq, %311, %322 : vector<1x16xi32>
    %324 = vector.extract_strided_slice %141 {offsets = [2, 0], sizes = [1, 16], strides = [1, 1]} : vector<4x16xi32> to vector<1x16xi32>
    %325 = arith.select %323, %324, %321 : vector<1x16xi1>, vector<1x16xi32>
    %c3_i32_49 = arith.constant 3 : i32
    %326 = vector.broadcast %c3_i32_49 : i32 to vector<1x16xi32>
    %327 = arith.cmpi eq, %311, %326 : vector<1x16xi32>
    %328 = vector.extract_strided_slice %141 {offsets = [3, 0], sizes = [1, 16], strides = [1, 1]} : vector<4x16xi32> to vector<1x16xi32>
    %329 = arith.select %327, %328, %325 : vector<1x16xi1>, vector<1x16xi32>
    %c3_i32_50 = arith.constant 3 : i32
    %330 = vector.broadcast %c3_i32_50 : i32 to vector<8x16xi32>
    %331 = arith.cmpi eq, %256, %330 : vector<8x16xi32>
    %332 = vector.shape_cast %329 : vector<1x16xi32> to vector<1x16xi32>
    %333 = vector.broadcast %332 : vector<1x16xi32> to vector<8x16xi32>
    %334 = arith.select %331, %333, %316 : vector<8x16xi1>, vector<8x16xi32>
    %335 = vector.extract_strided_slice %110 {offsets = [0, 0], sizes = [1, 16], strides = [1, 1]} : vector<4x16xi32> to vector<1x16xi32>
    %c1_i32_51 = arith.constant 1 : i32
    %336 = vector.broadcast %c1_i32_51 : i32 to vector<1x16xi32>
    %337 = arith.cmpi eq, %329, %336 : vector<1x16xi32>
    %338 = vector.extract_strided_slice %110 {offsets = [1, 0], sizes = [1, 16], strides = [1, 1]} : vector<4x16xi32> to vector<1x16xi32>
    %339 = arith.select %337, %338, %335 : vector<1x16xi1>, vector<1x16xi32>
    %c2_i32_52 = arith.constant 2 : i32
    %340 = vector.broadcast %c2_i32_52 : i32 to vector<1x16xi32>
    %341 = arith.cmpi eq, %329, %340 : vector<1x16xi32>
    %342 = vector.extract_strided_slice %110 {offsets = [2, 0], sizes = [1, 16], strides = [1, 1]} : vector<4x16xi32> to vector<1x16xi32>
    %343 = arith.select %341, %342, %339 : vector<1x16xi1>, vector<1x16xi32>
    %c3_i32_53 = arith.constant 3 : i32
    %344 = vector.broadcast %c3_i32_53 : i32 to vector<1x16xi32>
    %345 = arith.cmpi eq, %329, %344 : vector<1x16xi32>
    %346 = vector.extract_strided_slice %110 {offsets = [3, 0], sizes = [1, 16], strides = [1, 1]} : vector<4x16xi32> to vector<1x16xi32>
    %347 = arith.select %345, %346, %343 : vector<1x16xi1>, vector<1x16xi32>
    %c2_i32_54 = arith.constant 2 : i32
    %348 = vector.broadcast %c2_i32_54 : i32 to vector<8x16xi32>
    %349 = arith.cmpi eq, %256, %348 : vector<8x16xi32>
    %350 = vector.shape_cast %347 : vector<1x16xi32> to vector<1x16xi32>
    %351 = vector.broadcast %350 : vector<1x16xi32> to vector<8x16xi32>
    %352 = arith.select %349, %351, %334 : vector<8x16xi1>, vector<8x16xi32>
    %353 = vector.extract_strided_slice %79 {offsets = [0, 0], sizes = [1, 16], strides = [1, 1]} : vector<4x16xi32> to vector<1x16xi32>
    %c1_i32_55 = arith.constant 1 : i32
    %354 = vector.broadcast %c1_i32_55 : i32 to vector<1x16xi32>
    %355 = arith.cmpi eq, %347, %354 : vector<1x16xi32>
    %356 = vector.extract_strided_slice %79 {offsets = [1, 0], sizes = [1, 16], strides = [1, 1]} : vector<4x16xi32> to vector<1x16xi32>
    %357 = arith.select %355, %356, %353 : vector<1x16xi1>, vector<1x16xi32>
    %c2_i32_56 = arith.constant 2 : i32
    %358 = vector.broadcast %c2_i32_56 : i32 to vector<1x16xi32>
    %359 = arith.cmpi eq, %347, %358 : vector<1x16xi32>
    %360 = vector.extract_strided_slice %79 {offsets = [2, 0], sizes = [1, 16], strides = [1, 1]} : vector<4x16xi32> to vector<1x16xi32>
    %361 = arith.select %359, %360, %357 : vector<1x16xi1>, vector<1x16xi32>
    %c3_i32_57 = arith.constant 3 : i32
    %362 = vector.broadcast %c3_i32_57 : i32 to vector<1x16xi32>
    %363 = arith.cmpi eq, %347, %362 : vector<1x16xi32>
    %364 = vector.extract_strided_slice %79 {offsets = [3, 0], sizes = [1, 16], strides = [1, 1]} : vector<4x16xi32> to vector<1x16xi32>
    %365 = arith.select %363, %364, %361 : vector<1x16xi1>, vector<1x16xi32>
    %c1_i32_58 = arith.constant 1 : i32
    %366 = vector.broadcast %c1_i32_58 : i32 to vector<8x16xi32>
    %367 = arith.cmpi eq, %256, %366 : vector<8x16xi32>
    %368 = vector.shape_cast %365 : vector<1x16xi32> to vector<1x16xi32>
    %369 = vector.broadcast %368 : vector<1x16xi32> to vector<8x16xi32>
    %370 = arith.select %367, %369, %352 : vector<8x16xi1>, vector<8x16xi32>
    %371 = vector.extract_strided_slice %48 {offsets = [0, 0], sizes = [1, 16], strides = [1, 1]} : vector<4x16xi32> to vector<1x16xi32>
    %c1_i32_59 = arith.constant 1 : i32
    %372 = vector.broadcast %c1_i32_59 : i32 to vector<1x16xi32>
    %373 = arith.cmpi eq, %365, %372 : vector<1x16xi32>
    %374 = vector.extract_strided_slice %48 {offsets = [1, 0], sizes = [1, 16], strides = [1, 1]} : vector<4x16xi32> to vector<1x16xi32>
    %375 = arith.select %373, %374, %371 : vector<1x16xi1>, vector<1x16xi32>
    %c2_i32_60 = arith.constant 2 : i32
    %376 = vector.broadcast %c2_i32_60 : i32 to vector<1x16xi32>
    %377 = arith.cmpi eq, %365, %376 : vector<1x16xi32>
    %378 = vector.extract_strided_slice %48 {offsets = [2, 0], sizes = [1, 16], strides = [1, 1]} : vector<4x16xi32> to vector<1x16xi32>
    %379 = arith.select %377, %378, %375 : vector<1x16xi1>, vector<1x16xi32>
    %c3_i32_61 = arith.constant 3 : i32
    %380 = vector.broadcast %c3_i32_61 : i32 to vector<1x16xi32>
    %381 = arith.cmpi eq, %365, %380 : vector<1x16xi32>
    %382 = vector.extract_strided_slice %48 {offsets = [3, 0], sizes = [1, 16], strides = [1, 1]} : vector<4x16xi32> to vector<1x16xi32>
    %383 = arith.select %381, %382, %379 : vector<1x16xi1>, vector<1x16xi32>
    %c0_i32_62 = arith.constant 0 : i32
    %384 = vector.broadcast %c0_i32_62 : i32 to vector<8x16xi32>
    %385 = arith.cmpi eq, %256, %384 : vector<8x16xi32>
    %386 = vector.shape_cast %383 : vector<1x16xi32> to vector<1x16xi32>
    %387 = vector.broadcast %386 : vector<1x16xi32> to vector<8x16xi32>
    %388 = arith.select %385, %387, %370 : vector<8x16xi1>, vector<8x16xi32>
    %c0_63 = arith.constant 0 : index
    %c0_64 = arith.constant 0 : index
    %c0_65 = arith.constant 0 : index
    %389 = vector.load %arg5[%c0_63, %c0_64, %c0_65] : memref<1x8x16xi32, #tpu.memory_space<vmem>>, vector<1x8x16xi32>
    %390 = vector.shape_cast %389 : vector<1x8x16xi32> to vector<8x16xi32>
    %391 = vector.shape_cast %388 : vector<8x16xi32> to vector<1x8x16xi32>
    tpu.vector_store %arg5[%c0_63, %c0_64, %c0_65], %391 {strides = array<i32>} : memref<1x8x16xi32, #tpu.memory_space<vmem>>, vector<1x8x16xi32>,
    return
  }
  func.func @transform_0(%arg0: i32) -> (i32, i32) {
    %c0_i32 = arith.constant 0 : i32
    %c0_i32_0 = arith.constant 0 : i32
    return %c0_i32, %arg0 : i32, i32
  }
  func.func @transform_1(%arg0: i32) -> (i32, i32) {
    %c0_i32 = arith.constant 0 : i32
    %c0_i32_0 = arith.constant 0 : i32
    %c0_i32_1 = arith.constant 0 : i32
    return %c0_i32, %c0_i32_0 : i32, i32
  }
  func.func @transform_2(%arg0: i32) -> (i32, i32) {
    %c0_i32 = arith.constant 0 : i32
    %c0_i32_0 = arith.constant 0 : i32
    %c0_i32_1 = arith.constant 0 : i32
    return %c0_i32, %c0_i32_0 : i32, i32
  }
  func.func @transform_3(%arg0: i32) -> (i32, i32) {
    %c0_i32 = arith.constant 0 : i32
    %c0_i32_0 = arith.constant 0 : i32
    %c0_i32_1 = arith.constant 0 : i32
    return %c0_i32, %c0_i32_0 : i32, i32
  }
  func.func @transform_4(%arg0: i32) -> (i32, i32, i32) {
    %c0_i32 = arith.constant 0 : i32
    %c0_i32_0 = arith.constant 0 : i32
    %c0_i32_1 = arith.constant 0 : i32
    return %arg0, %c0_i32, %c0_i32_0 : i32, i32, i32
  }
}

</mosaic_0001>

<llo_original>
// kernel: tpu_custom_call.1
$region0: #{tpu_custom_call.1}
  #allocation0 [shape = 'u32[]', space=smem, size = 0x4, offset = 0x4, fixed_abs, tag = 'smem constant byte address 0x4 - core index']
  #allocation1 [shape = 'u32[144,128]{1,0:T(1,128)}', space=vmem, size = 0x12000, scoped, tag = 'internal scratch']
  %s0 = inlined_call_operand.hbm [shape: bf16[97,128], index: 0, kind: input, shape index: {}]
  %s1 = inlined_call_operand.hbm [shape: bf16[32,97], index: 1, kind: input, shape index: {}]
  %s2 = inlined_call_operand.vmem [shape: bf16[4,32], index: 2, kind: input, shape index: {}]
  %s3 = inlined_call_operand.vmem [shape: f32[4,7], index: 3, kind: input, shape index: {}]
  %s4 = inlined_call_operand.hbm [shape: s32[1,8,16], index: 4, kind: output, shape index: {}]
  %s5 = sld [smem:[#allocation0]]
  $region34: #{tpu_custom_call.1} parent=0
    _
  %s7 = ssub.s32 1, %s5
  %s8 = scalar_select 0, %s7, %s5
  $region1: #{tpu_custom_call.1} parent=0
    #allocation2 [shape = 'u8[26624]{0}', space=vmem, size = 0x6800, scoped, tag = 'input window, operand 0, single buffered']
    #allocation3 [shape = 's32[1]{0}', space=sflag, size = 0x4, scoped, tag = 'scoped memory for tpu_custom_call.1']
    #allocation4 [shape = 's32[1]{0}', space=sflag, size = 0x4, scoped, tag = 'scoped memory for tpu_custom_call.1']
    #allocation5 [shape = 'u8[8192]{0}', space=vmem, size = 0x2000, scoped, tag = 'input window, operand 1, single buffered']
    #allocation6 [shape = 's32[1]{0}', space=sflag, size = 0x4, scoped, tag = 'scoped memory for tpu_custom_call.1']
    #allocation7 [shape = 'u8[4096]{0}', space=vmem, size = 0x1000, scoped, tag = 'output window, operand 0, single buffered']
    %9 = vsyncpa [#allocation3], 0
    %10 = vsyncpa [#allocation6], 0
    %11 = vsyncpa [#allocation4], 0
    // Predicated region
    $region2: #{tpu_custom_call.1} parent=1 // pred_check
      _
    $region3: #{tpu_custom_call.1} parent=1 // pred_check_branch
      %13 = sbr.rel (0) target = $region5
    $region4: #{tpu_custom_call.1} parent=1 // pred_region
      %s15 = ssub.s32 832, 832
      %16 = vsyncadd [#allocation3], %s15
      %s17 = sshll.u32 [#allocation2], 4
      %s18 = int_to_ptr.vmem [resolvable:$true] %s17
      %23 = dma.hbm_to_vmem [thread:$0]  %s0, 832, %s18, [#allocation3], 64, 64, 4
    $region5: #{tpu_custom_call.1} parent=1 // pred_fallthru
      _
    // Predicated region
    $region6: #{tpu_custom_call.1} parent=1 // pred_check
      _
    $region7: #{tpu_custom_call.1} parent=1 // pred_check_branch
      %25 = sbr.rel (0) target = $region9
    $region8: #{tpu_custom_call.1} parent=1 // pred_region
      %s27 = ssub.s32 256, 256
      %28 = vsyncadd [#allocation6], %s27
      %s29 = sshll.u32 [#allocation5], 4
      %s30 = int_to_ptr.vmem [resolvable:$true] %s29
      %35 = dma.hbm_to_vmem [thread:$0]  %s1, 256, %s30, [#allocation6], 64, 64, 4
    $region9: #{tpu_custom_call.1} parent=1 // pred_fallthru
      _
    // Predicated region
    $region10: #{tpu_custom_call.1} parent=1 // pred_check
      _
    $region11: #{tpu_custom_call.1} parent=1 // pred_check_branch
      %37 = sbr.rel (0) target = $region13
    $region12: #{tpu_custom_call.1} parent=1 // pred_region
      _
    $region13: #{tpu_custom_call.1} parent=1 // pred_fallthru
      _
    // Predicated region
    $region14: #{tpu_custom_call.1} parent=1 // pred_check
      _
    $region15: #{tpu_custom_call.1} parent=1 // pred_check_branch
      %39 = sbr.rel (0) target = $region17
    $region16: #{tpu_custom_call.1} parent=1 // pred_region
      _
    $region17: #{tpu_custom_call.1} parent=1 // pred_fallthru
      _
    // Predicated region
    $region18: #{tpu_custom_call.1} parent=1 // pred_check
      _
    $region19: #{tpu_custom_call.1} parent=1 // pred_check_branch
      %41 = sbr.rel (0) target = $region21
    $region20: #{tpu_custom_call.1} parent=1 // pred_region
      %42 = dma.done [#allocation3], 832
    $region21: #{tpu_custom_call.1} parent=1 // pred_fallthru
      _
    // Predicated region
    $region22: #{tpu_custom_call.1} parent=1 // pred_check
      _
    $region23: #{tpu_custom_call.1} parent=1 // pred_check_branch
      %44 = sbr.rel (0) target = $region25
    $region24: #{tpu_custom_call.1} parent=1 // pred_region
      %45 = dma.done [#allocation6], 256
    $region25: #{tpu_custom_call.1} parent=1 // pred_fallthru
      _
    %v47 = vld [vmem:[#allocation5] sm:$0xf]
    %v48 = vld [vmem:[#allocation5 + $0x4] sm:$0xf]
    %v49 = vld [vmem:[#allocation5 + $0x8] sm:$0xf]
    %v50 = vld [vmem:[#allocation5 + $0xc] sm:$0xf]
    %v51 = vld [vmem:[#allocation2] sm:$0xf]
    %v52 = vld [vmem:[#allocation2 + $0x4] sm:$0xf]
    %v53 = vld [vmem:[#allocation2 + $0x8] sm:$0xf]
    %v54 = vld [vmem:[#allocation2 + $0xc] sm:$0xf]
    %v55 = vld [vmem:[#allocation2 + $0x10] sm:$0xf]
    %v56 = vld [vmem:[#allocation2 + $0x14] sm:$0xf]
    %v57 = vld [vmem:[#allocation2 + $0x18] sm:$0xf]
    %v58 = vld [vmem:[#allocation2 + $0x1c] sm:$0xf]
    %v59 = vld [vmem:[#allocation2 + $0x20] sm:$0xf]
    %v60 = vld [vmem:[#allocation2 + $0x24] sm:$0xf]
    %v61 = vld [vmem:[#allocation2 + $0x28] sm:$0xf]
    %v62 = vld [vmem:[#allocation2 + $0x2c] sm:$0xf]
    %v63 = vld [vmem:[#allocation2 + $0x30] sm:$0x1]
    %v68 = vunpack.c.l.b16 %v47
    %v69 = vunpack.c.l.b16 %v48
    %v70 = vunpack.c.l.b16 %v49
    %v71 = vunpack.c.l.b16 %v50
    %v72 = vpack.c.b16 %v69, %v68
    %v73 = vpack.c.b16 %v71, %v70
    %v87 = vunpack.c.l.b16 %v51
    %v88 = vunpack.c.l.b16 %v52
    %v89 = vunpack.c.l.b16 %v53
    %v90 = vunpack.c.l.b16 %v54
    %v91 = vunpack.c.l.b16 %v55
    %v92 = vunpack.c.l.b16 %v56
    %v93 = vunpack.c.l.b16 %v57
    %v94 = vunpack.c.l.b16 %v58
    %v95 = vunpack.c.l.b16 %v59
    %v96 = vunpack.c.l.b16 %v60
    %v97 = vunpack.c.l.b16 %v61
    %v98 = vunpack.c.l.b16 %v62
    %v99 = vunpack.c.l.b16 %v63
    %v100 = vpack.c.b16 %v88, %v87
    %v101 = vpack.c.b16 %v90, %v89
    %v102 = vpack.c.b16 %v92, %v91
    %v103 = vpack.c.b16 %v94, %v93
    %v104 = vpack.c.b16 %v96, %v95
    %v105 = vpack.c.b16 %v98, %v97
    %v106 = vpack.c.b16 %v99, %v99
    %vm113 = vcmask 793600
    %v115 = vsel %vm113, %v72, 0
    %v118 = vsel %vm113, %v73, 0
    %vm120 = vcmask 1040384
    %v121 = vsel 0, 4294967295, 65535
    %v122 = vsel %vm120, %v121, 0
    %v124 = vand.u32 %v106, %v122
    %126 = vmatprep.subr.bf16.mxu0 0
    %127 = vmatpush1.bf16.msra.mxu0 %v100
    %128 = vmatprep.subr.bf16.mxu0 0
    %129 = vmatpush1.bf16.msra.mxu0 %v101
    %130 = vmatprep.subr.bf16.mxu0 0
    %131 = vmatpush1.bf16.msra.mxu0 %v102
    %132 = vmatprep.subr.bf16.mxu0 0
    %133 = vmatpush1.bf16.msra.mxu0 %v103
    %134 = vmatprep.subr.bf16.mxu0 0
    %135 = vmatpush1.bf16.msra.mxu0 %v104
    %136 = vmatprep.subr.bf16.mxu0 0
    %137 = vmatpush1.bf16.msra.mxu0 %v105
    %138 = vmatprep.subr.bf16.mxu0 0
    %139 = vmatpush1.bf16.msra.mxu0 %v124
    %140 = vmatprep.subr.bf16.mxu0 0
    %141 = vmatpush1.bf16.msra.mxu0 0
    %142 = vmatprep.subr.bf16.mxu0 0
    %143 = vmatpush1.bf16.msra.mxu0 0
    %144 = vmatprep.subr.bf16.mxu0 0
    %145 = vmatpush1.bf16.msra.mxu0 0
    %146 = vmatprep.subr.bf16.mxu0 0
    %147 = vmatpush1.bf16.msra.mxu0 0
    %148 = vmatprep.subr.bf16.mxu0 0
    %149 = vmatpush1.bf16.msra.mxu0 0
    %150 = vmatprep.subr.bf16.mxu0 0
    %151 = vmatpush1.bf16.msra.mxu0 0
    %152 = vmatprep.subr.bf16.mxu0 0
    %153 = vmatpush1.bf16.msra.mxu0 0
    %154 = vmatprep.subr.bf16.mxu0 0
    %155 = vmatpush1.bf16.msra.mxu0 0
    %156 = vmatprep.subr.bf16.mxu0 0
    %157 = vmatpush1.bf16.msra.mxu0 0
    %158 = vmatprep.mubr.bf16.mxu0 0
    %159 = vmatmul.mubr.bf16.gmra.mrb[0].mxu0 %v115
    %v160 = vpop.f32.mrb[0].mxu0
    %v161 = vadd.f32 0.0, %v160
    %v162 = vpop.f32.mrb[0].mxu0
    %v163 = vpop.f32.mrb[0].mxu0
    %v164 = vadd.f32 0.0, %v163
    %v165 = vpop.f32.mrb[0].mxu0
    %166 = vmatprep.mubr.bf16.mxu0 0
    %167 = vmatmul.mubr.bf16.gmra.mrb[0].mxu0 %v118
    %v168 = vpop.f32.mrb[0].mxu0
    %v169 = vadd.f32 0.0, %v168
    %v170 = vpop.f32.mrb[0].mxu0
    %v171 = vpop.f32.mrb[0].mxu0
    %v172 = vadd.f32 0.0, %v171
    %v173 = vpop.f32.mrb[0].mxu0
    %174 = vdwg.mxu0
    %v175 = vmax.f32 %v161, 0.0
    %v176 = vmax.f32 %v164, 0.0
    %v177 = vmax.f32 %v169, 0.0
    %v178 = vmax.f32 %v172, 0.0
    %v179 = vld [vmem:[%s2] sm:$0x3]
    %v180 = vpack.c.bf16 %v176, %v175
    %v181 = vpack.c.bf16 %v178, %v177
    %v182 = vld [vmem:[%s3] sm:$0xf]
    %184 = vset.pattern.permute.xlu0 4
    %185 = vperm.xlu0 %184, %v182
    %v186 = vpop.permute.xlu0 %185
    %vm188 = vcmask 261120
    %v190 = vsel %vm188, %v179, 0
    %192 = vmatprep.subr.bf16.mxu0 0
    %193 = vmatpush1.bf16.msra.mxu0 %v180
    %194 = vmatprep.subr.bf16.mxu0 0
    %195 = vmatpush1.bf16.msra.mxu0 %v181
    %196 = vmatprep.subr.bf16.mxu0 0
    %197 = vmatpush1.bf16.msra.mxu0 0
    %198 = vmatprep.subr.bf16.mxu0 0
    %199 = vmatpush1.bf16.msra.mxu0 0
    %200 = vmatprep.subr.bf16.mxu0 0
    %201 = vmatpush1.bf16.msra.mxu0 0
    %202 = vmatprep.subr.bf16.mxu0 0
    %203 = vmatpush1.bf16.msra.mxu0 0
    %204 = vmatprep.subr.bf16.mxu0 0
    %205 = vmatpush1.bf16.msra.mxu0 0
    %206 = vmatprep.subr.bf16.mxu0 0
    %207 = vmatpush1.bf16.msra.mxu0 0
    %208 = vmatprep.subr.bf16.mxu0 0
    %209 = vmatpush1.bf16.msra.mxu0 0
    %210 = vmatprep.subr.bf16.mxu0 0
    %211 = vmatpush1.bf16.msra.mxu0 0
    %212 = vmatprep.subr.bf16.mxu0 0
    %213 = vmatpush1.bf16.msra.mxu0 0
    %214 = vmatprep.subr.bf16.mxu0 0
    %215 = vmatpush1.bf16.msra.mxu0 0
    %216 = vmatprep.subr.bf16.mxu0 0
    %217 = vmatpush1.bf16.msra.mxu0 0
    %218 = vmatprep.subr.bf16.mxu0 0
    %219 = vmatpush1.bf16.msra.mxu0 0
    %220 = vmatprep.subr.bf16.mxu0 0
    %221 = vmatpush1.bf16.msra.mxu0 0
    %222 = vmatprep.subr.bf16.mxu0 0
    %223 = vmatpush1.bf16.msra.mxu0 0
    %224 = vmatprep.mubr.bf16.mxu0 0
    %225 = vmatmul.mubr.bf16.gmra.mrb[0].mxu0 %v190
    %v226 = vpop.f32.mrb[0].mxu0
    %v227 = vadd.f32 %v186, %v226
    %v228 = vpop.f32.mrb[0].mxu0
    %v229 = vpop.f32.mrb[0].mxu0
    %v230 = vpop.f32.mrb[0].mxu0
    %231 = vdwg.mxu0
    %232 = vset.pattern.permute.xlu0 5
    %233 = vperm.xlu0 %232, %v182
    %v234 = vpop.permute.xlu0 %233
    %v236 = vadd.f32 %v234, %v227
    %v237 = vlaneseq
    %v238 = vshrl.u32 %v237, 7
    %v239 = vsub.s32 0, %v238
    %v240 = vrot.slane %v236, %v239
    %241 = vset.pattern.permute.xlu0 0
    %242 = vperm.xlu0 %241, %v182
    %v243 = vpop.permute.xlu0 %242
    %v245 = vadd.f32 %v240, %v243
    %v246 = vlaneseq
    %v247 = vshrl.u32 %v246, 7
    %v248 = vsub.s32 1, %v247
    %v249 = vrot.slane %v236, %v248
    %250 = vset.pattern.permute.xlu0 1
    %251 = vperm.xlu0 %250, %v182
    %v252 = vpop.permute.xlu0 %251
    %v254 = vadd.f32 %v249, %v252
    %vm255 = vcmp.gt.f32.partialorder %v254, %v245
    %v256 = vsel %vm255, 1, 0
    %v257 = vmax.f32 %v245, %v254
    %v258 = vlaneseq
    %v259 = vshrl.u32 %v258, 7
    %v260 = vsub.s32 2, %v259
    %v261 = vrot.slane %v236, %v260
    %262 = vset.pattern.permute.xlu0 2
    %263 = vperm.xlu0 %262, %v182
    %v264 = vpop.permute.xlu0 %263
    %v266 = vadd.f32 %v261, %v264
    %vm267 = vcmp.gt.f32.partialorder %v266, %v257
    %v268 = vsel %vm267, 2, %v256
    %v269 = vmax.f32 %v257, %v266
    %v270 = vlaneseq
    %v271 = vshrl.u32 %v270, 7
    %v272 = vsub.s32 3, %v271
    %v273 = vrot.slane %v236, %v272
    %274 = vset.pattern.permute.xlu0 3
    %275 = vperm.xlu0 %274, %v182
    %v276 = vpop.permute.xlu0 %275
    %v278 = vadd.f32 %v273, %v276
    %vm279 = vcmp.gt.f32.partialorder %v278, %v269
    %v280 = vsel %vm279, 3, %v268
    %v281 = vmax.f32 %v269, %v278
    %283 = vrot.lane.b32.xlu0 %v227, 112
    %v284 = vpop.permute.xlu0 %283
    %v286 = vadd.f32 %v281, %v284
    %v287 = vlaneseq
    %v288 = vshrl.u32 %v287, 7
    %v289 = vsub.s32 0, %v288
    %v290 = vrot.slane %v286, %v289
    %v291 = vadd.f32 %v290, %v243
    %v292 = vlaneseq
    %v293 = vshrl.u32 %v292, 7
    %v294 = vsub.s32 1, %v293
    %v295 = vrot.slane %v286, %v294
    %v296 = vadd.f32 %v295, %v252
    %vm297 = vcmp.gt.f32.partialorder %v296, %v291
    %v298 = vsel %vm297, 1, 0
    %v299 = vmax.f32 %v291, %v296
    %v300 = vlaneseq
    %v301 = vshrl.u32 %v300, 7
    %v302 = vsub.s32 2, %v301
    %v303 = vrot.slane %v286, %v302
    %v304 = vadd.f32 %v303, %v264
    %vm305 = vcmp.gt.f32.partialorder %v304, %v299
    %v306 = vsel %vm305, 2, %v298
    %v307 = vmax.f32 %v299, %v304
    %v308 = vlaneseq
    %v309 = vshrl.u32 %v308, 7
    %v310 = vsub.s32 3, %v309
    %v311 = vrot.slane %v286, %v310
    %v312 = vadd.f32 %v311, %v276
    %vm313 = vcmp.gt.f32.partialorder %v312, %v307
    %v314 = vsel %vm313, 3, %v306
    %v315 = vmax.f32 %v307, %v312
    %316 = vrot.lane.b32.xlu0 %v227, 96
    %v317 = vpop.permute.xlu0 %316
    %v319 = vadd.f32 %v315, %v317
    %v320 = vlaneseq
    %v321 = vshrl.u32 %v320, 7
    %v322 = vsub.s32 0, %v321
    %v323 = vrot.slane %v319, %v322
    %v324 = vadd.f32 %v323, %v243
    %v325 = vlaneseq
    %v326 = vshrl.u32 %v325, 7
    %v327 = vsub.s32 1, %v326
    %v328 = vrot.slane %v319, %v327
    %v329 = vadd.f32 %v328, %v252
    %vm330 = vcmp.gt.f32.partialorder %v329, %v324
    %v331 = vsel %vm330, 1, 0
    %v332 = vmax.f32 %v324, %v329
    %v333 = vlaneseq
    %v334 = vshrl.u32 %v333, 7
    %v335 = vsub.s32 2, %v334
    %v336 = vrot.slane %v319, %v335
    %v337 = vadd.f32 %v336, %v264
    %vm338 = vcmp.gt.f32.partialorder %v337, %v332
    %v339 = vsel %vm338, 2, %v331
    %v340 = vmax.f32 %v332, %v337
    %v341 = vlaneseq
    %v342 = vshrl.u32 %v341, 7
    %v343 = vsub.s32 3, %v342
    %v344 = vrot.slane %v319, %v343
    %v345 = vadd.f32 %v344, %v276
    %vm346 = vcmp.gt.f32.partialorder %v345, %v340
    %v347 = vsel %vm346, 3, %v339
    %v348 = vmax.f32 %v340, %v345
    %349 = vrot.lane.b32.xlu0 %v227, 80
    %v350 = vpop.permute.xlu0 %349
    %v352 = vadd.f32 %v348, %v350
    %v353 = vlaneseq
    %v354 = vshrl.u32 %v353, 7
    %v355 = vsub.s32 0, %v354
    %v356 = vrot.slane %v352, %v355
    %v357 = vadd.f32 %v356, %v243
    %v358 = vlaneseq
    %v359 = vshrl.u32 %v358, 7
    %v360 = vsub.s32 1, %v359
    %v361 = vrot.slane %v352, %v360
    %v362 = vadd.f32 %v361, %v252
    %vm363 = vcmp.gt.f32.partialorder %v362, %v357
    %v364 = vsel %vm363, 1, 0
    %v365 = vmax.f32 %v357, %v362
    %v366 = vlaneseq
    %v367 = vshrl.u32 %v366, 7
    %v368 = vsub.s32 2, %v367
    %v369 = vrot.slane %v352, %v368
    %v370 = vadd.f32 %v369, %v264
    %vm371 = vcmp.gt.f32.partialorder %v370, %v365
    %v372 = vsel %vm371, 2, %v364
    %v373 = vmax.f32 %v365, %v370
    %v374 = vlaneseq
    %v375 = vshrl.u32 %v374, 7
    %v376 = vsub.s32 3, %v375
    %v377 = vrot.slane %v352, %v376
    %v378 = vadd.f32 %v377, %v276
    %vm379 = vcmp.gt.f32.partialorder %v378, %v373
    %v380 = vsel %vm379, 3, %v372
    %v381 = vmax.f32 %v373, %v378
    %382 = vrot.lane.b32.xlu0 %v227, 64
    %v383 = vpop.permute.xlu0 %382
    %v385 = vadd.f32 %v381, %v383
    %v386 = vlaneseq
    %v387 = vshrl.u32 %v386, 7
    %v388 = vsub.s32 0, %v387
    %v389 = vrot.slane %v385, %v388
    %v390 = vadd.f32 %v389, %v243
    %v391 = vlaneseq
    %v392 = vshrl.u32 %v391, 7
    %v393 = vsub.s32 1, %v392
    %v394 = vrot.slane %v385, %v393
    %v395 = vadd.f32 %v394, %v252
    %vm396 = vcmp.gt.f32.partialorder %v395, %v390
    %v397 = vsel %vm396, 1, 0
    %v398 = vmax.f32 %v390, %v395
    %v399 = vlaneseq
    %v400 = vshrl.u32 %v399, 7
    %v401 = vsub.s32 2, %v400
    %v402 = vrot.slane %v385, %v401
    %v403 = vadd.f32 %v402, %v264
    %vm404 = vcmp.gt.f32.partialorder %v403, %v398
    %v405 = vsel %vm404, 2, %v397
    %v406 = vmax.f32 %v398, %v403
    %v407 = vlaneseq
    %v408 = vshrl.u32 %v407, 7
    %v409 = vsub.s32 3, %v408
    %v410 = vrot.slane %v385, %v409
    %v411 = vadd.f32 %v410, %v276
    %vm412 = vcmp.gt.f32.partialorder %v411, %v406
    %v413 = vsel %vm412, 3, %v405
    %v414 = vmax.f32 %v406, %v411
    %415 = vrot.lane.b32.xlu0 %v227, 48
    %v416 = vpop.permute.xlu0 %415
    %v418 = vadd.f32 %v414, %v416
    %v419 = vlaneseq
    %v420 = vshrl.u32 %v419, 7
    %v421 = vsub.s32 0, %v420
    %v422 = vrot.slane %v418, %v421
    %v423 = vadd.f32 %v422, %v243
    %v424 = vlaneseq
    %v425 = vshrl.u32 %v424, 7
    %v426 = vsub.s32 1, %v425
    %v427 = vrot.slane %v418, %v426
    %v428 = vadd.f32 %v427, %v252
    %vm429 = vcmp.gt.f32.partialorder %v428, %v423
    %v430 = vsel %vm429, 1, 0
    %v431 = vmax.f32 %v423, %v428
    %v432 = vlaneseq
    %v433 = vshrl.u32 %v432, 7
    %v434 = vsub.s32 2, %v433
    %v435 = vrot.slane %v418, %v434
    %v436 = vadd.f32 %v435, %v264
    %vm437 = vcmp.gt.f32.partialorder %v436, %v431
    %v438 = vsel %vm437, 2, %v430
    %v439 = vmax.f32 %v431, %v436
    %v440 = vlaneseq
    %v441 = vshrl.u32 %v440, 7
    %v442 = vsub.s32 3, %v441
    %v443 = vrot.slane %v418, %v442
    %v444 = vadd.f32 %v443, %v276
    %vm445 = vcmp.gt.f32.partialorder %v444, %v439
    %v446 = vsel %vm445, 3, %v438
    %v447 = vmax.f32 %v439, %v444
    %448 = vrot.lane.b32.xlu0 %v227, 32
    %v449 = vpop.permute.xlu0 %448
    %v451 = vadd.f32 %v447, %v449
    %v452 = vlaneseq
    %v453 = vshrl.u32 %v452, 7
    %v454 = vsub.s32 0, %v453
    %v455 = vrot.slane %v451, %v454
    %v456 = vadd.f32 %v455, %v243
    %v457 = vlaneseq
    %v458 = vshrl.u32 %v457, 7
    %v459 = vsub.s32 1, %v458
    %v460 = vrot.slane %v451, %v459
    %v461 = vadd.f32 %v460, %v252
    %vm462 = vcmp.gt.f32.partialorder %v461, %v456
    %v463 = vsel %vm462, 1, 0
    %v464 = vmax.f32 %v456, %v461
    %v465 = vlaneseq
    %v466 = vshrl.u32 %v465, 7
    %v467 = vsub.s32 2, %v466
    %v468 = vrot.slane %v451, %v467
    %v469 = vadd.f32 %v468, %v264
    %vm470 = vcmp.gt.f32.partialorder %v469, %v464
    %v471 = vsel %vm470, 2, %v463
    %v472 = vmax.f32 %v464, %v469
    %v473 = vlaneseq
    %v474 = vshrl.u32 %v473, 7
    %v475 = vsub.s32 3, %v474
    %v476 = vrot.slane %v451, %v475
    %v477 = vadd.f32 %v476, %v276
    %vm478 = vcmp.gt.f32.partialorder %v477, %v472
    %v479 = vsel %vm478, 3, %v471
    %v480 = vmax.f32 %v472, %v477
    %481 = vrot.lane.b32.xlu0 %v227, 16
    %v482 = vpop.permute.xlu0 %481
    %v484 = vadd.f32 %v480, %v482
    %485 = vset.pattern.permute.xlu0 6
    %486 = vperm.xlu0 %485, %v182
    %v487 = vpop.permute.xlu0 %486
    %v489 = vadd.f32 %v484, %v487
    %v491 = vrot.slane %v489, 7
    %vm493 = vcmp.gt.f32.partialorder %v489, %v491
    %v494 = vsel %vm493, 1, 0
    %v495 = vrot.slane %v489, 1
    %v497 = vmax.f32 %v489, %v495
    %v499 = vrot.slane %v497, 6
    %vm501 = vcmp.gt.f32.partialorder %v489, %v499
    %v502 = vrot.slane %v494, 7
    %v503 = vsel %vm501, 2, %v502
    %v504 = vrot.slane %v489, 2
    %v506 = vmax.f32 %v497, %v504
    %v508 = vrot.slane %v506, 5
    %vm510 = vcmp.gt.f32.partialorder %v489, %v508
    %v511 = vrot.slane %v503, 7
    %v512 = vsel %vm510, 3, %v511
    %v513 = vlaneseq
    %v514 = vshrl.u32 %v513, 7
    %vm515 = vcmp.eq.s32.totalorder %v514, 7
    %v516 = vlaneseq
    %v517 = vshrl.u32 %v516, 7
    %v518 = vsub.s32 3, %v517
    %v519 = vrot.slane %v512, %v518
    %v520 = vsel %vm515, %v519, 0
    %vm521 = vcmp.eq.s32.totalorder %v512, 1
    %v522 = vrot.slane %v479, 6
    %v523 = vrot.slane %v479, 5
    %v524 = vsel %vm521, %v522, %v523
    %vm525 = vcmp.eq.s32.totalorder %v512, 2
    %v526 = vrot.slane %v479, 7
    %v527 = vsel %vm525, %v526, %v524
    %vm528 = vcmp.eq.s32.totalorder %v512, 3
    %v529 = vsel %vm528, %v479, %v527
    %vm530 = vcmp.eq.s32.totalorder %v514, 6
    %v531 = vlaneseq
    %v532 = vshrl.u32 %v531, 7
    %v533 = vsub.s32 3, %v532
    %v534 = vrot.slane %v529, %v533
    %v535 = vsel %vm530, %v534, %v520
    %vm536 = vcmp.eq.s32.totalorder %v529, 1
    %v537 = vrot.slane %v446, 6
    %v538 = vrot.slane %v446, 5
    %v539 = vsel %vm536, %v537, %v538
    %vm540 = vcmp.eq.s32.totalorder %v529, 2
    %v541 = vrot.slane %v446, 7
    %v542 = vsel %vm540, %v541, %v539
    %vm543 = vcmp.eq.s32.totalorder %v529, 3
    %v544 = vsel %vm543, %v446, %v542
    %vm545 = vcmp.eq.s32.totalorder %v514, 5
    %v546 = vlaneseq
    %v547 = vshrl.u32 %v546, 7
    %v548 = vsub.s32 3, %v547
    %v549 = vrot.slane %v544, %v548
    %v550 = vsel %vm545, %v549, %v535
    %vm551 = vcmp.eq.s32.totalorder %v544, 1
    %v552 = vrot.slane %v413, 6
    %v553 = vrot.slane %v413, 5
    %v554 = vsel %vm551, %v552, %v553
    %vm555 = vcmp.eq.s32.totalorder %v544, 2
    %v556 = vrot.slane %v413, 7
    %v557 = vsel %vm555, %v556, %v554
    %vm558 = vcmp.eq.s32.totalorder %v544, 3
    %v559 = vsel %vm558, %v413, %v557
    %vm560 = vcmp.eq.s32.totalorder %v514, 4
    %v561 = vlaneseq
    %v562 = vshrl.u32 %v561, 7
    %v563 = vsub.s32 3, %v562
    %v564 = vrot.slane %v559, %v563
    %v565 = vsel %vm560, %v564, %v550
    %vm566 = vcmp.eq.s32.totalorder %v559, 1
    %v567 = vrot.slane %v380, 6
    %v568 = vrot.slane %v380, 5
    %v569 = vsel %vm566, %v567, %v568
    %vm570 = vcmp.eq.s32.totalorder %v559, 2
    %v571 = vrot.slane %v380, 7
    %v572 = vsel %vm570, %v571, %v569
    %vm573 = vcmp.eq.s32.totalorder %v559, 3
    %v574 = vsel %vm573, %v380, %v572
    %vm575 = vcmp.eq.s32.totalorder %v514, 3
    %v576 = vlaneseq
    %v577 = vshrl.u32 %v576, 7
    %v578 = vsub.s32 3, %v577
    %v579 = vrot.slane %v574, %v578
    %v580 = vsel %vm575, %v579, %v565
    %vm581 = vcmp.eq.s32.totalorder %v574, 1
    %v582 = vrot.slane %v347, 6
    %v583 = vrot.slane %v347, 5
    %v584 = vsel %vm581, %v582, %v583
    %vm585 = vcmp.eq.s32.totalorder %v574, 2
    %v586 = vrot.slane %v347, 7
    %v587 = vsel %vm585, %v586, %v584
    %vm588 = vcmp.eq.s32.totalorder %v574, 3
    %v589 = vsel %vm588, %v347, %v587
    %vm590 = vcmp.eq.s32.totalorder %v514, 2
    %v591 = vlaneseq
    %v592 = vshrl.u32 %v591, 7
    %v593 = vsub.s32 3, %v592
    %v594 = vrot.slane %v589, %v593
    %v595 = vsel %vm590, %v594, %v580
    %vm596 = vcmp.eq.s32.totalorder %v589, 1
    %v597 = vrot.slane %v314, 6
    %v598 = vrot.slane %v314, 5
    %v599 = vsel %vm596, %v597, %v598
    %vm600 = vcmp.eq.s32.totalorder %v589, 2
    %v601 = vrot.slane %v314, 7
    %v602 = vsel %vm600, %v601, %v599
    %vm603 = vcmp.eq.s32.totalorder %v589, 3
    %v604 = vsel %vm603, %v314, %v602
    %vm605 = vcmp.eq.s32.totalorder %v514, 1
    %v606 = vlaneseq
    %v607 = vshrl.u32 %v606, 7
    %v608 = vsub.s32 3, %v607
    %v609 = vrot.slane %v604, %v608
    %v610 = vsel %vm605, %v609, %v595
    %vm611 = vcmp.eq.s32.totalorder %v604, 1
    %v612 = vrot.slane %v280, 6
    %v613 = vrot.slane %v280, 5
    %v614 = vsel %vm611, %v612, %v613
    %vm615 = vcmp.eq.s32.totalorder %v604, 2
    %v616 = vrot.slane %v280, 7
    %v617 = vsel %vm615, %v616, %v614
    %vm618 = vcmp.eq.s32.totalorder %v604, 3
    %v619 = vsel %vm618, %v280, %v617
    %vm620 = vcmp.eq.s32.totalorder %v514, 0
    %v621 = vlaneseq
    %v622 = vshrl.u32 %v621, 7
    %v623 = vsub.s32 3, %v622
    %v624 = vrot.slane %v619, %v623
    %v625 = vsel %vm620, %v624, %v610
    %vm626 = vcmask 130048
    %627 = vst.msk [vmem:[#allocation7] sm:$0xff] %vm626, %v625
    // Predicated region
    $region26: #{tpu_custom_call.1} parent=1 // pred_check
      _
    $region27: #{tpu_custom_call.1} parent=1 // pred_check_branch
      %629 = sbr.rel (0) target = $region29
    $region28: #{tpu_custom_call.1} parent=1 // pred_region
      %s631 = ssub.s32 128, 128
      %632 = vsyncadd [#allocation4], %s631
      %s634 = sshll.u32 [#allocation7], 4
      %s635 = int_to_ptr.vmem [resolvable:$true] %s634
      %637 = dma.vmem_to_hbm [thread:$0]  %s635, 128, %s4, [#allocation4]
    $region29: #{tpu_custom_call.1} parent=1 // pred_fallthru
      _
    // Predicated region
    $region30: #{tpu_custom_call.1} parent=1 // pred_check
      _
    $region31: #{tpu_custom_call.1} parent=1 // pred_check_branch
      %639 = sbr.rel (0) target = $region33
    $region32: #{tpu_custom_call.1} parent=1 // pred_region
      %640 = dma.done [#allocation4], 128
    $region33: #{tpu_custom_call.1} parent=1 // pred_fallthru
      _
    %641 = vsyncpa [#allocation3], 1
    %642 = vsyncpa [#allocation6], 1
    %643 = vsyncpa [#allocation4], 1

</llo_original>
